<compile_context>
chip_gen: v7x
topology: tpu7x:2x2x1
jax: 0.10.0
libtpu: 0.0.40
codegen_flags: <defaults>
</compile_context>

<pallas_src>
import functools

import jax
import jax.numpy as jnp
from jax import lax
from jax.experimental import pallas as pl
from jax.experimental.pallas import tpu as pltpu


def _round_up(x, m):
    return ((x + m - 1) // m) * m


def _activate_normalize(h, use_elu):
    """ReLU/ELU then row-wise L2 normalize (F.normalize, p=2, dim=1, eps=1e-12)."""
    if use_elu:
        # F.elu (alpha=1). Clamp the unselected branch so expm1 never makes inf.
        h = jnp.where(h > 0, h, jnp.expm1(jnp.minimum(h, 0.0)))
    else:
        h = jnp.maximum(h, 0.0)
    ss = jnp.sum(h * h, axis=1, keepdims=True)
    # rsqrt(max(ss, 1e-24)) == 1 / max(||h||_2, 1e-12); EUP op, zero-row safe.
    inv = lax.rsqrt(jnp.maximum(ss, 1e-24))
    return h * inv


def _gnn_concat_kernel(self_ref, agg_ref, w_self_ref, w_agg_ref, o_ref, *,
                       use_elu, compute_dtype):
    """cat([self, agg], 1) @ W == self @ W_top + agg @ W_bottom, fused act+norm."""
    s = self_ref[...].astype(compute_dtype)     # VPU cast, hidden under the MXU
    a = agg_ref[...].astype(compute_dtype)
    h = jnp.dot(s, w_self_ref[...], preferred_element_type=jnp.float32)
    h = h + jnp.dot(a, w_agg_ref[...], preferred_element_type=jnp.float32)
    o_ref[...] = _activate_normalize(h, use_elu).astype(o_ref.dtype)


def _gnn_agg_kernel(agg_ref, w_ref, o_ref, *, use_elu, compute_dtype):
    """gcn/gat path: combined = aggregate_feats."""
    a = agg_ref[...].astype(compute_dtype)
    h = jnp.dot(a, w_ref[...], preferred_element_type=jnp.float32)
    o_ref[...] = _activate_normalize(h, use_elu).astype(o_ref.dtype)


def _vmem_budget_bytes():
    """~75% of this chip's physical VMEM (v7x ~48 MiB, v5e/v6e ~96 MiB), capped."""
    cap = 64 * 1024 * 1024
    try:
        cap = int(pltpu.get_tpu_info().vmem_capacity_bytes)
    except Exception:
        pass
    return min(cap * 3 // 4, 100 * 1024 * 1024)


def _pick_row_tile(n_rows, tm_max):
    """Row tile: >= 2 tiles when possible (megacore) with bounded tail waste."""
    n8 = _round_up(max(n_rows, 1), 8)
    if n8 <= 16:
        return n8
    n_tiles = max(2, pl.cdiv(n8, tm_max))
    return min(tm_max, _round_up(pl.cdiv(n8, n_tiles), 8))


def gnn_layer(self_feats, aggregate_feats, weight, *, a_loss="none",
              gcn=False, gat=False, compute_dtype=jnp.bfloat16,
              out_dtype=jnp.float32, tm=None):
    """Pallas TPU implementation of GNNLayer.forward."""
    N, input_size = aggregate_feats.shape
    out_size = weight.shape[1]
    use_elu = (a_loss != "none")
    agg_only = bool(gcn or gat)

    k_pad = _round_up(input_size, 128)       # MXU / lane alignment for K
    out_pad = _round_up(out_size, 128)       # lane-dense output (unmasked vst)

    # ---- feature operands: avoid wrapper pad/cast copies whenever possible ---
    if k_pad == input_size:
        # Stream f32 features straight from HBM; bf16 cast happens in-kernel.
        feats = (aggregate_feats,) if agg_only else (self_feats, aggregate_feats)
    else:
        # Zero-pad K (required for correctness of valid rows); since we are
        # copying anyway, cast to the compute dtype to halve the kernel read.
        def pad_feat(x):
            return jnp.pad(x, ((0, 0), (0, k_pad - input_size))).astype(compute_dtype)
        feats = ((pad_feat(aggregate_feats),) if agg_only
                 else (pad_feat(self_feats), pad_feat(aggregate_feats)))
    feat_itemsize = jnp.dtype(feats[0].dtype).itemsize

    # ---- weights: small; pad + cast + split the concat in the wrapper --------
    def pad_w(w):
        return jnp.pad(
            w, ((0, k_pad - w.shape[0]), (0, out_pad - w.shape[1]))
        ).astype(compute_dtype)

    if agg_only:
        weights = (pad_w(weight),)
    else:
        weights = (pad_w(weight[:input_size]), pad_w(weight[input_size:]))

    # ---- row tiling (no N padding: Pallas masks the ragged last block) -------
    vmem_budget = _vmem_budget_bytes()
    tm_max = 1024 if vmem_budget >= 80 * 1024 * 1024 else 512
    if tm is None:
        tm = _pick_row_tile(N, tm_max)
    tm = max(8, _round_up(min(tm, _round_up(N, 8)), 8))

    n_feat = len(feats)
    w_itemsize = jnp.dtype(compute_dtype).itemsize
    out_itemsize = jnp.dtype(out_dtype).itemsize

    def vmem_estimate(rows):
        return (n_feat * 2 * rows * k_pad * feat_itemsize        # dbl-buffered feats
                + 2 * rows * out_pad * out_itemsize               # dbl-buffered out
                + len(weights) * k_pad * out_pad * w_itemsize)    # resident weights

    while vmem_estimate(tm) > vmem_budget and tm > 8:
        tm = max(8, _round_up(tm // 2, 8))
    # TODO(synk): for weights too large to keep resident even single-buffered
    # (>~2k x 2k bf16 on v7x) add an output-column / K-reduction grid axis.

    grid = (pl.cdiv(N, tm),)

    feat_spec = pl.BlockSpec((tm, k_pad), lambda i: (i, 0))
    out_spec = pl.BlockSpec((tm, out_pad), lambda i: (i, 0))

    compiler_params = pltpu.CompilerParams(
        dimension_semantics=("parallel",),     # independent row tiles (megacore)
        vmem_limit_bytes=int(vmem_budget),
    )

    cost = pl.CostEstimate(
        flops=2 * N * k_pad * out_pad * n_feat,
        transcendentals=(N * out_pad if use_elu else 0) + N,
        bytes_accessed=(sum(int(f.size) for f in feats) * feat_itemsize
                        + sum(int(w.size) for w in weights) * w_itemsize
                        + N * out_pad * out_itemsize),
    )

    kernel = (functools.partial(_gnn_agg_kernel, use_elu=use_elu,
                                compute_dtype=compute_dtype)
              if agg_only else
              functools.partial(_gnn_concat_kernel, use_elu=use_elu,
                                compute_dtype=compute_dtype))

    def build(single_buffer_weights):
        if single_buffer_weights:
            # Constant index map -> the second pipeline buffer is dead weight;
            # single-buffering halves resident-weight VMEM (matters on v7x).
            w_spec = pl.BlockSpec((k_pad, out_pad), lambda i: (0, 0),
                                  pipeline_mode=pl.Buffered(1))
        else:
            w_spec = pl.BlockSpec((k_pad, out_pad), lambda i: (0, 0))
        return pl.pallas_call(
            kernel,
            out_shape=jax.ShapeDtypeStruct((N, out_pad), out_dtype),
            grid=grid,
            in_specs=[feat_spec] * n_feat + [w_spec] * len(weights),
            out_specs=out_spec,
            compiler_params=compiler_params,
            cost_estimate=cost,
        )

    args = feats + weights
    try:
        out = build(True)(*args)
    except Exception:
        # Fallback for jax versions without pipeline_mode / Buffered(1) support.
        out = build(False)(*args)

    # Zero-padded weight columns contribute 0 to the matmul and to the L2 norm,
    # so slicing them off afterwards preserves exact F.normalize semantics.
    return out[:, :out_size]


def xavier_uniform(key, shape, dtype=jnp.float32):
    fan_in, fan_out = shape
    bound = (6.0 / (fan_in + fan_out)) ** 0.5
    return jax.random.uniform(key, shape, dtype, minval=-bound, maxval=bound)


def _reference(self_feats, aggregate_feats, weight, a_loss, gcn, gat,
               compute_dtype=jnp.bfloat16):
    """Pure-JAX reference with the same bf16 operand rounding (f32 accumulate)."""
    cast = lambda x: x.astype(compute_dtype).astype(jnp.float32)
    sf, af, w = cast(self_feats), cast(aggregate_feats), cast(weight)
    combined = af if (gcn or gat) else jnp.concatenate([sf, af], axis=1)
    h = combined @ w
    h = jnp.maximum(h, 0.0) if a_loss == "none" else jnp.where(h > 0, h, jnp.expm1(h))
    norm = jnp.sqrt(jnp.sum(h * h, axis=1, keepdims=True))
    return h / jnp.maximum(norm, 1e-12)


if __name__ == "__main__":
    key = jax.random.PRNGKey(0)
    k_w1, k_s1, k_a1, k_w2, k_a2 = jax.random.split(key, 5)

    # Case 1: concat (GraphSAGE) path, ReLU, exact row-tile fit.
    N1, in1, out1 = 16, 32, 64
    w1 = xavier_uniform(k_w1, (2 * in1, out1))
    sf1 = jax.random.normal(k_s1, (N1, in1), jnp.float32)
    af1 = jax.random.normal(k_a1, (N1, in1), jnp.float32)
    o1 = gnn_layer(sf1, af1, w1, a_loss="none", gcn=False, gat=False)
    jax.block_until_ready(o1)
    r1 = _reference(sf1, af1, w1, "none", False, False)
    assert o1.shape == (N1, out1)
    assert jnp.allclose(o1, r1, atol=2e-3, rtol=2e-3), float(jnp.max(jnp.abs(o1 - r1)))

    # Case 2: gcn path, ELU, ragged last row block and non-128 out_size.
    N2, in2, out2 = 20, 32, 48
    w2 = xavier_uniform(k_w2, (in2, out2))
    af2 = jax.random.normal(k_a2, (N2, in2), jnp.float32)
    o2 = gnn_layer(af2, af2, w2, a_loss="elu", gcn=True, gat=False)
    jax.block_until_ready(o2)
    r2 = _reference(af2, af2, w2, "elu", True, False)
    assert o2.shape == (N2, out2)
    assert jnp.allclose(o2, r2, atol=2e-3, rtol=2e-3), float(jnp.max(jnp.abs(o2 - r2)))

    print("KERNEL_OK")
</pallas_src>

<mosaic_0001>
module attributes {stable_mosaic.version = 11 : i64} {
  func.func @_gnn_concat_kernel(%arg0: i32, %arg1: memref<16x128xbf16, #tpu.memory_space<vmem>>, %arg2: memref<16x128xbf16, #tpu.memory_space<vmem>>, %arg3: memref<128x128xbf16, #tpu.memory_space<vmem>>, %arg4: memref<128x128xbf16, #tpu.memory_space<vmem>>, %arg5: memref<16x128xf32, #tpu.memory_space<vmem>>) attributes {dimension_semantics = [#tpu.dimension_semantics<parallel>], iteration_bounds = array<i64: 1>, scalar_prefetch = 0 : i64, scratch_operands = 0 : i64, tpu.core_type = #tpu.core_type<tc>, window_params = [{transform_indices = @transform_0, window_bounds = array<i64: 16, 128>}, {transform_indices = @transform_1, window_bounds = array<i64: 16, 128>}, {pipeline_mode = #tpu.pipeline_mode<synchronous>, transform_indices = @transform_2, window_bounds = array<i64: 128, 128>}, {pipeline_mode = #tpu.pipeline_mode<synchronous>, transform_indices = @transform_3, window_bounds = array<i64: 128, 128>}, {transform_indices = @transform_4, window_bounds = array<i64: 16, 128>}]} {
    %c0 = arith.constant 0 : index
    %c0_0 = arith.constant 0 : index
    %0 = vector.load %arg1[%c0, %c0_0] : memref<16x128xbf16, #tpu.memory_space<vmem>>, vector<16x128xbf16>
    %c0_1 = arith.constant 0 : index
    %c0_2 = arith.constant 0 : index
    %1 = vector.load %arg2[%c0_1, %c0_2] : memref<16x128xbf16, #tpu.memory_space<vmem>>, vector<16x128xbf16>
    %c0_3 = arith.constant 0 : index
    %c0_4 = arith.constant 0 : index
    %2 = vector.load %arg3[%c0_3, %c0_4] : memref<128x128xbf16, #tpu.memory_space<vmem>>, vector<128x128xbf16>
    %cst = arith.constant dense<0.000000e+00> : vector<16x128xf32>
    %3 = tpu.matmul %0, %2, %cst {dimension_numbers = #tpu.dot_dimension_numbers<[1], [0], [0], [1], [0, 0, 1, 1], [], []>} : vector<16x128xbf16>, vector<128x128xbf16>, vector<16x128xf32> -> vector<16x128xf32>
    %c0_5 = arith.constant 0 : index
    %c0_6 = arith.constant 0 : index
    %4 = vector.load %arg4[%c0_5, %c0_6] : memref<128x128xbf16, #tpu.memory_space<vmem>>, vector<128x128xbf16>
    %cst_7 = arith.constant dense<0.000000e+00> : vector<16x128xf32>
    %5 = tpu.matmul %1, %4, %cst_7 {dimension_numbers = #tpu.dot_dimension_numbers<[1], [0], [0], [1], [0, 0, 1, 1], [], []>} : vector<16x128xbf16>, vector<128x128xbf16>, vector<16x128xf32> -> vector<16x128xf32>
    %6 = arith.addf %3, %5 : vector<16x128xf32>
    %cst_8 = arith.constant 0.000000e+00 : f32
    %7 = vector.broadcast %cst_8 : f32 to vector<16x128xf32>
    %8 = arith.maximumf %6, %7 : vector<16x128xf32>
    %9 = arith.mulf %8, %8 : vector<16x128xf32>
    %cst_9 = arith.constant dense<0.000000e+00> : vector<16xf32>
    %10 = vector.multi_reduction <add>, %9, %cst_9 [1] : vector<16x128xf32> to vector<16xf32>
    %11 = vector.shape_cast %10 : vector<16xf32> to vector<16x1xf32>
    %cst_10 = arith.constant 1.000000e-24 : f32
    %12 = vector.broadcast %cst_10 : f32 to vector<16x1xf32>
    %13 = arith.maximumf %11, %12 : vector<16x1xf32>
    %14 = math.rsqrt %13 : vector<16x1xf32>
    %15 = vector.broadcast %14 : vector<16x1xf32> to vector<16x128xf32>
    %16 = arith.mulf %8, %15 : vector<16x128xf32>
    %c0_11 = arith.constant 0 : index
    %c0_12 = arith.constant 0 : index
    %17 = vector.load %arg5[%c0_11, %c0_12] : memref<16x128xf32, #tpu.memory_space<vmem>>, vector<16x128xf32>
    tpu.vector_store %arg5[%c0_11, %c0_12], %16 {strides = array<i32>} : memref<16x128xf32, #tpu.memory_space<vmem>>, vector<16x128xf32>,
    return
  }
  func.func @transform_0(%arg0: i32) -> (i32, i32) {
    %c0_i32 = arith.constant 0 : i32
    %c0_i32_0 = arith.constant 0 : i32
    return %arg0, %c0_i32 : i32, i32
  }
  func.func @transform_1(%arg0: i32) -> (i32, i32) {
    %c0_i32 = arith.constant 0 : i32
    %c0_i32_0 = arith.constant 0 : i32
    return %arg0, %c0_i32 : i32, i32
  }
  func.func @transform_2(%arg0: i32) -> (i32, i32) {
    %c0_i32 = arith.constant 0 : i32
    %c0_i32_0 = arith.constant 0 : i32
    %c0_i32_1 = arith.constant 0 : i32
    return %c0_i32, %c0_i32_0 : i32, i32
  }
  func.func @transform_3(%arg0: i32) -> (i32, i32) {
    %c0_i32 = arith.constant 0 : i32
    %c0_i32_0 = arith.constant 0 : i32
    %c0_i32_1 = arith.constant 0 : i32
    return %c0_i32, %c0_i32_0 : i32, i32
  }
  func.func @transform_4(%arg0: i32) -> (i32, i32) {
    %c0_i32 = arith.constant 0 : i32
    %c0_i32_0 = arith.constant 0 : i32
    return %arg0, %c0_i32 : i32, i32
  }
}

module attributes {stable_mosaic.version = 11 : i64} {
  func.func @_gnn_concat_kernel(%arg0: i32, %arg1: memref<16x128xbf16, #tpu.memory_space<vmem>>, %arg2: memref<16x128xbf16, #tpu.memory_space<vmem>>, %arg3: memref<128x128xbf16, #tpu.memory_space<vmem>>, %arg4: memref<128x128xbf16, #tpu.memory_space<vmem>>, %arg5: memref<16x128xf32, #tpu.memory_space<vmem>>) attributes {dimension_semantics = [#tpu.dimension_semantics<parallel>], iteration_bounds = array<i64: 1>, scalar_prefetch = 0 : i64, scratch_operands = 0 : i64, tpu.core_type = #tpu.core_type<tc>, window_params = [{transform_indices = @transform_0, window_bounds = array<i64: 16, 128>}, {transform_indices = @transform_1, window_bounds = array<i64: 16, 128>}, {pipeline_mode = #tpu.pipeline_mode<synchronous>, transform_indices = @transform_2, window_bounds = array<i64: 128, 128>}, {pipeline_mode = #tpu.pipeline_mode<synchronous>, transform_indices = @transform_3, window_bounds = array<i64: 128, 128>}, {transform_indices = @transform_4, window_bounds = array<i64: 16, 128>}]} {
    %c0 = arith.constant 0 : index
    %c0_0 = arith.constant 0 : index
    %0 = vector.load %arg1[%c0, %c0_0] : memref<16x128xbf16, #tpu.memory_space<vmem>>, vector<16x128xbf16>
    %c0_1 = arith.constant 0 : index
    %c0_2 = arith.constant 0 : index
    %1 = vector.load %arg2[%c0_1, %c0_2] : memref<16x128xbf16, #tpu.memory_space<vmem>>, vector<16x128xbf16>
    %c0_3 = arith.constant 0 : index
    %c0_4 = arith.constant 0 : index
    %2 = vector.load %arg3[%c0_3, %c0_4] : memref<128x128xbf16, #tpu.memory_space<vmem>>, vector<128x128xbf16>
    %cst = arith.constant dense<0.000000e+00> : vector<16x128xf32>
    %3 = tpu.matmul %0, %2, %cst {dimension_numbers = #tpu.dot_dimension_numbers<[1], [0], [0], [1], [0, 0, 1, 1], [], []>} : vector<16x128xbf16>, vector<128x128xbf16>, vector<16x128xf32> -> vector<16x128xf32>
    %c0_5 = arith.constant 0 : index
    %c0_6 = arith.constant 0 : index
    %4 = vector.load %arg4[%c0_5, %c0_6] : memref<128x128xbf16, #tpu.memory_space<vmem>>, vector<128x128xbf16>
    %cst_7 = arith.constant dense<0.000000e+00> : vector<16x128xf32>
    %5 = tpu.matmul %1, %4, %cst_7 {dimension_numbers = #tpu.dot_dimension_numbers<[1], [0], [0], [1], [0, 0, 1, 1], [], []>} : vector<16x128xbf16>, vector<128x128xbf16>, vector<16x128xf32> -> vector<16x128xf32>
    %6 = arith.addf %3, %5 : vector<16x128xf32>
    %cst_8 = arith.constant 0.000000e+00 : f32
    %7 = vector.broadcast %cst_8 : f32 to vector<16x128xf32>
    %8 = arith.maximumf %6, %7 : vector<16x128xf32>
    %9 = arith.mulf %8, %8 : vector<16x128xf32>
    %cst_9 = arith.constant dense<0.000000e+00> : vector<16xf32>
    %10 = vector.multi_reduction <add>, %9, %cst_9 [1] : vector<16x128xf32> to vector<16xf32>
    %11 = vector.shape_cast %10 : vector<16xf32> to vector<16x1xf32>
    %cst_10 = arith.constant 1.000000e-24 : f32
    %12 = vector.broadcast %cst_10 : f32 to vector<16x1xf32>
    %13 = arith.maximumf %11, %12 : vector<16x1xf32>
    %14 = math.rsqrt %13 : vector<16x1xf32>
    %15 = vector.broadcast %14 : vector<16x1xf32> to vector<16x128xf32>
    %16 = arith.mulf %8, %15 : vector<16x128xf32>
    %c0_11 = arith.constant 0 : index
    %c0_12 = arith.constant 0 : index
    %17 = vector.load %arg5[%c0_11, %c0_12] : memref<16x128xf32, #tpu.memory_space<vmem>>, vector<16x128xf32>
    tpu.vector_store %arg5[%c0_11, %c0_12], %16 {strides = array<i32>} : memref<16x128xf32, #tpu.memory_space<vmem>>, vector<16x128xf32>,
    return
  }
  func.func @transform_0(%arg0: i32) -> (i32, i32) {
    %c0_i32 = arith.constant 0 : i32
    %c0_i32_0 = arith.constant 0 : i32
    return %arg0, %c0_i32 : i32, i32
  }
  func.func @transform_1(%arg0: i32) -> (i32, i32) {
    %c0_i32 = arith.constant 0 : i32
    %c0_i32_0 = arith.constant 0 : i32
    return %arg0, %c0_i32 : i32, i32
  }
  func.func @transform_2(%arg0: i32) -> (i32, i32) {
    %c0_i32 = arith.constant 0 : i32
    %c0_i32_0 = arith.constant 0 : i32
    %c0_i32_1 = arith.constant 0 : i32
    return %c0_i32, %c0_i32_0 : i32, i32
  }
  func.func @transform_3(%arg0: i32) -> (i32, i32) {
    %c0_i32 = arith.constant 0 : i32
    %c0_i32_0 = arith.constant 0 : i32
    %c0_i32_1 = arith.constant 0 : i32
    return %c0_i32, %c0_i32_0 : i32, i32
  }
  func.func @transform_4(%arg0: i32) -> (i32, i32) {
    %c0_i32 = arith.constant 0 : i32
    %c0_i32_0 = arith.constant 0 : i32
    return %arg0, %c0_i32 : i32, i32
  }
}

</mosaic_0001>

<llo_original>
// kernel: tpu_custom_call.1
$region0: #{tpu_custom_call.1}
  #allocation0 [shape = 'u32[]', space=smem, size = 0x4, offset = 0x4, fixed_abs, tag = 'smem constant byte address 0x4 - core index']
  #allocation1 [shape = 'u32[144,128]{1,0:T(1,128)}', space=vmem, size = 0x12000, scoped, tag = 'internal scratch']
  %s0 = inlined_call_operand.hbm [shape: bf16[16,128], index: 0, kind: input, shape index: {}]
  %s1 = inlined_call_operand.hbm [shape: bf16[16,128], index: 1, kind: input, shape index: {}]
  %s2 = inlined_call_operand.hbm [shape: bf16[128,128], index: 2, kind: input, shape index: {}]
  %s3 = inlined_call_operand.hbm [shape: bf16[128,128], index: 3, kind: input, shape index: {}]
  %s4 = inlined_call_operand.hbm [shape: f32[16,128], index: 4, kind: output, shape index: {}]
  %s5 = sld [smem:[#allocation0]]
  $region42: #{tpu_custom_call.1} parent=0
    _
  %s7 = ssub.s32 1, %s5
  %s8 = scalar_select 0, %s7, %s5
  $region1: #{tpu_custom_call.1} parent=0
    #allocation2 [shape = 'u8[4096]{0}', space=vmem, size = 0x1000, scoped, tag = 'input window, operand 0, single buffered']
    #allocation3 [shape = 's32[1]{0}', space=sflag, size = 0x4, scoped, tag = 'scoped memory for tpu_custom_call.1']
    #allocation4 [shape = 's32[1]{0}', space=sflag, size = 0x4, scoped, tag = 'scoped memory for tpu_custom_call.1']
    #allocation5 [shape = 'u8[4096]{0}', space=vmem, size = 0x1000, scoped, tag = 'input window, operand 1, single buffered']
    #allocation6 [shape = 's32[1]{0}', space=sflag, size = 0x4, scoped, tag = 'scoped memory for tpu_custom_call.1']
    #allocation7 [shape = 'u8[32768]{0}', space=vmem, size = 0x8000, scoped, tag = 'input window, operand 2, single buffered']
    #allocation8 [shape = 'u8[32768]{0}', space=vmem, size = 0x8000, scoped, tag = 'input window, operand 3, single buffered']
    #allocation9 [shape = 's32[1]{0}', space=sflag, size = 0x4, scoped, tag = 'scoped memory for tpu_custom_call.1']
    #allocation10 [shape = 'u8[8192]{0}', space=vmem, size = 0x2000, scoped, tag = 'output window, operand 0, single buffered']
    %9 = vsyncpa [#allocation3], 0
    %10 = vsyncpa [#allocation6], 0
    %11 = vsyncpa [#allocation9], 0
    %12 = vsyncpa [#allocation4], 0
    // Predicated region
    $region2: #{tpu_custom_call.1} parent=1 // pred_check
      _
    $region3: #{tpu_custom_call.1} parent=1 // pred_check_branch
      %14 = sbr.rel (0) target = $region5
    $region4: #{tpu_custom_call.1} parent=1 // pred_region
      %s16 = ssub.s32 128, 128
      %17 = vsyncadd [#allocation3], %s16
      %s18 = sshll.u32 [#allocation2], 4
      %s19 = int_to_ptr.vmem [resolvable:$true] %s18
      %24 = dma.hbm_to_vmem [thread:$0]  %s0, 128, %s19, [#allocation3], 64, 64, 4
    $region5: #{tpu_custom_call.1} parent=1 // pred_fallthru
      _
    // Predicated region
    $region6: #{tpu_custom_call.1} parent=1 // pred_check
      _
    $region7: #{tpu_custom_call.1} parent=1 // pred_check_branch
      %26 = sbr.rel (0) target = $region9
    $region8: #{tpu_custom_call.1} parent=1 // pred_region
      %s28 = ssub.s32 128, 128
      %29 = vsyncadd [#allocation6], %s28
      %s30 = sshll.u32 [#allocation5], 4
      %s31 = int_to_ptr.vmem [resolvable:$true] %s30
      %36 = dma.hbm_to_vmem [thread:$0]  %s1, 128, %s31, [#allocation6], 64, 64, 4
    $region9: #{tpu_custom_call.1} parent=1 // pred_fallthru
      _
    // Predicated region
    $region10: #{tpu_custom_call.1} parent=1 // pred_check
      _
    $region11: #{tpu_custom_call.1} parent=1 // pred_check_branch
      %38 = sbr.rel (0) target = $region13
    $region12: #{tpu_custom_call.1} parent=1 // pred_region
      %s40 = ssub.s32 1024, 1024
      %41 = vsyncadd [#allocation6], %s40
      %s42 = sshll.u32 [#allocation7], 4
      %s43 = int_to_ptr.vmem [resolvable:$true] %s42
      %48 = dma.hbm_to_vmem [thread:$0]  %s2, 1024, %s43, [#allocation6], 64, 64, 4
    $region13: #{tpu_custom_call.1} parent=1 // pred_fallthru
      _
    // Predicated region
    $region14: #{tpu_custom_call.1} parent=1 // pred_check
      _
    $region15: #{tpu_custom_call.1} parent=1 // pred_check_branch
      %50 = sbr.rel (0) target = $region17
    $region16: #{tpu_custom_call.1} parent=1 // pred_region
      %s52 = ssub.s32 1024, 1024
      %53 = vsyncadd [#allocation9], %s52
      %s54 = sshll.u32 [#allocation8], 4
      %s55 = int_to_ptr.vmem [resolvable:$true] %s54
      %60 = dma.hbm_to_vmem [thread:$0]  %s3, 1024, %s55, [#allocation9], 64, 64, 4
    $region17: #{tpu_custom_call.1} parent=1 // pred_fallthru
      _
    // Predicated region
    $region18: #{tpu_custom_call.1} parent=1 // pred_check
      _
    $region19: #{tpu_custom_call.1} parent=1 // pred_check_branch
      %62 = sbr.rel (0) target = $region21
    $region20: #{tpu_custom_call.1} parent=1 // pred_region
      %63 = dma.done [#allocation3], 128
    $region21: #{tpu_custom_call.1} parent=1 // pred_fallthru
      _
    // Predicated region
    $region22: #{tpu_custom_call.1} parent=1 // pred_check
      _
    $region23: #{tpu_custom_call.1} parent=1 // pred_check_branch
      %65 = sbr.rel (0) target = $region25
    $region24: #{tpu_custom_call.1} parent=1 // pred_region
      %66 = dma.done [#allocation6], 128
    $region25: #{tpu_custom_call.1} parent=1 // pred_fallthru
      _
    // Predicated region
    $region26: #{tpu_custom_call.1} parent=1 // pred_check
      _
    $region27: #{tpu_custom_call.1} parent=1 // pred_check_branch
      %68 = sbr.rel (0) target = $region29
    $region28: #{tpu_custom_call.1} parent=1 // pred_region
      %69 = dma.done [#allocation6], 1024
    $region29: #{tpu_custom_call.1} parent=1 // pred_fallthru
      _
    // Predicated region
    $region30: #{tpu_custom_call.1} parent=1 // pred_check
      _
    $region31: #{tpu_custom_call.1} parent=1 // pred_check_branch
      %71 = sbr.rel (0) target = $region33
    $region32: #{tpu_custom_call.1} parent=1 // pred_region
      %72 = dma.done [#allocation9], 1024
    $region33: #{tpu_custom_call.1} parent=1 // pred_fallthru
      _
    %v74 = vld [vmem:[#allocation2] sm:$0xf]
    %v75 = vld [vmem:[#allocation2 + $0x4] sm:$0xf]
    %v76 = vld [vmem:[#allocation5] sm:$0xf]
    %v77 = vld [vmem:[#allocation5 + $0x4] sm:$0xf]
    %v78 = vld [vmem:[#allocation7] sm:$0xf]
    %v79 = vld [vmem:[#allocation7 + $0x4] sm:$0xf]
    %v80 = vld [vmem:[#allocation7 + $0x8] sm:$0xf]
    %v81 = vld [vmem:[#allocation7 + $0xc] sm:$0xf]
    %v82 = vld [vmem:[#allocation7 + $0x10] sm:$0xf]
    %v83 = vld [vmem:[#allocation7 + $0x14] sm:$0xf]
    %v84 = vld [vmem:[#allocation7 + $0x18] sm:$0xf]
    %v85 = vld [vmem:[#allocation7 + $0x1c] sm:$0xf]
    %v86 = vld [vmem:[#allocation7 + $0x20] sm:$0xf]
    %v87 = vld [vmem:[#allocation7 + $0x24] sm:$0xf]
    %v88 = vld [vmem:[#allocation7 + $0x28] sm:$0xf]
    %v89 = vld [vmem:[#allocation7 + $0x2c] sm:$0xf]
    %v90 = vld [vmem:[#allocation7 + $0x30] sm:$0xf]
    %v91 = vld [vmem:[#allocation7 + $0x34] sm:$0xf]
    %v92 = vld [vmem:[#allocation7 + $0x38] sm:$0xf]
    %v93 = vld [vmem:[#allocation7 + $0x3c] sm:$0xf]
    %v94 = vld [vmem:[#allocation8] sm:$0xf]
    %v95 = vld [vmem:[#allocation8 + $0x4] sm:$0xf]
    %v96 = vld [vmem:[#allocation8 + $0x8] sm:$0xf]
    %v97 = vld [vmem:[#allocation8 + $0xc] sm:$0xf]
    %v98 = vld [vmem:[#allocation8 + $0x10] sm:$0xf]
    %v99 = vld [vmem:[#allocation8 + $0x14] sm:$0xf]
    %v100 = vld [vmem:[#allocation8 + $0x18] sm:$0xf]
    %v101 = vld [vmem:[#allocation8 + $0x1c] sm:$0xf]
    %v102 = vld [vmem:[#allocation8 + $0x20] sm:$0xf]
    %v103 = vld [vmem:[#allocation8 + $0x24] sm:$0xf]
    %v104 = vld [vmem:[#allocation8 + $0x28] sm:$0xf]
    %v105 = vld [vmem:[#allocation8 + $0x2c] sm:$0xf]
    %v106 = vld [vmem:[#allocation8 + $0x30] sm:$0xf]
    %v107 = vld [vmem:[#allocation8 + $0x34] sm:$0xf]
    %v108 = vld [vmem:[#allocation8 + $0x38] sm:$0xf]
    %v109 = vld [vmem:[#allocation8 + $0x3c] sm:$0xf]
    %v112 = vunpack.c.l.b16 %v76
    %v113 = vunpack.c.l.b16 %v77
    %v114 = vpack.c.b16 %v113, %v112
    %v132 = vunpack.c.l.b16 %v94
    %v133 = vunpack.c.l.b16 %v95
    %v134 = vunpack.c.l.b16 %v96
    %v135 = vunpack.c.l.b16 %v97
    %v136 = vunpack.c.l.b16 %v98
    %v137 = vunpack.c.l.b16 %v99
    %v138 = vunpack.c.l.b16 %v100
    %v139 = vunpack.c.l.b16 %v101
    %v140 = vunpack.c.l.b16 %v102
    %v141 = vunpack.c.l.b16 %v103
    %v142 = vunpack.c.l.b16 %v104
    %v143 = vunpack.c.l.b16 %v105
    %v144 = vunpack.c.l.b16 %v106
    %v145 = vunpack.c.l.b16 %v107
    %v146 = vunpack.c.l.b16 %v108
    %v147 = vunpack.c.l.b16 %v109
    %v148 = vpack.c.b16 %v133, %v132
    %v149 = vpack.c.b16 %v135, %v134
    %v150 = vpack.c.b16 %v137, %v136
    %v151 = vpack.c.b16 %v139, %v138
    %v152 = vpack.c.b16 %v141, %v140
    %v153 = vpack.c.b16 %v143, %v142
    %v154 = vpack.c.b16 %v145, %v144
    %v155 = vpack.c.b16 %v147, %v146
    %164 = vmatprep.subr.bf16.mxu0 0
    %165 = vmatpush1.bf16.msra.mxu0 %v148
    %166 = vmatprep.subr.bf16.mxu0 0
    %167 = vmatpush1.bf16.msra.mxu0 %v149
    %168 = vmatprep.subr.bf16.mxu0 0
    %169 = vmatpush1.bf16.msra.mxu0 %v150
    %170 = vmatprep.subr.bf16.mxu0 0
    %171 = vmatpush1.bf16.msra.mxu0 %v151
    %172 = vmatprep.subr.bf16.mxu0 0
    %173 = vmatpush1.bf16.msra.mxu0 %v152
    %174 = vmatprep.subr.bf16.mxu0 0
    %175 = vmatpush1.bf16.msra.mxu0 %v153
    %176 = vmatprep.subr.bf16.mxu0 0
    %177 = vmatpush1.bf16.msra.mxu0 %v154
    %178 = vmatprep.subr.bf16.mxu0 0
    %179 = vmatpush1.bf16.msra.mxu0 %v155
    %180 = vmatprep.subr.bf16.mxu0 0
    %181 = vmatpush1.bf16.msra.mxu0 0
    %182 = vmatprep.subr.bf16.mxu0 0
    %183 = vmatpush1.bf16.msra.mxu0 0
    %184 = vmatprep.subr.bf16.mxu0 0
    %185 = vmatpush1.bf16.msra.mxu0 0
    %186 = vmatprep.subr.bf16.mxu0 0
    %187 = vmatpush1.bf16.msra.mxu0 0
    %188 = vmatprep.subr.bf16.mxu0 0
    %189 = vmatpush1.bf16.msra.mxu0 0
    %190 = vmatprep.subr.bf16.mxu0 0
    %191 = vmatpush1.bf16.msra.mxu0 0
    %192 = vmatprep.subr.bf16.mxu0 0
    %193 = vmatpush1.bf16.msra.mxu0 0
    %194 = vmatprep.subr.bf16.mxu0 0
    %195 = vmatpush1.bf16.msra.mxu0 0
    %196 = vmatprep.mubr.bf16.mxu0 0
    %197 = vmatmul.mubr.bf16.gmra.mrb[0].mxu0 %v114
    %v198 = vpop.f32.mrb[0].mxu0
    %v199 = vadd.f32 0.0, %v198
    %v200 = vpop.f32.mrb[0].mxu0
    %v201 = vpop.f32.mrb[0].mxu0
    %v202 = vadd.f32 0.0, %v201
    %v203 = vpop.f32.mrb[0].mxu0
    %204 = vdwg.mxu0
    %v207 = vunpack.c.l.b16 %v74
    %v208 = vunpack.c.l.b16 %v75
    %v209 = vpack.c.b16 %v208, %v207
    %v227 = vunpack.c.l.b16 %v78
    %v228 = vunpack.c.l.b16 %v79
    %v229 = vunpack.c.l.b16 %v80
    %v230 = vunpack.c.l.b16 %v81
    %v231 = vunpack.c.l.b16 %v82
    %v232 = vunpack.c.l.b16 %v83
    %v233 = vunpack.c.l.b16 %v84
    %v234 = vunpack.c.l.b16 %v85
    %v235 = vunpack.c.l.b16 %v86
    %v236 = vunpack.c.l.b16 %v87
    %v237 = vunpack.c.l.b16 %v88
    %v238 = vunpack.c.l.b16 %v89
    %v239 = vunpack.c.l.b16 %v90
    %v240 = vunpack.c.l.b16 %v91
    %v241 = vunpack.c.l.b16 %v92
    %v242 = vunpack.c.l.b16 %v93
    %v243 = vpack.c.b16 %v228, %v227
    %v244 = vpack.c.b16 %v230, %v229
    %v245 = vpack.c.b16 %v232, %v231
    %v246 = vpack.c.b16 %v234, %v233
    %v247 = vpack.c.b16 %v236, %v235
    %v248 = vpack.c.b16 %v238, %v237
    %v249 = vpack.c.b16 %v240, %v239
    %v250 = vpack.c.b16 %v242, %v241
    %259 = vmatprep.subr.bf16.mxu0 0
    %260 = vmatpush1.bf16.msra.mxu0 %v243
    %261 = vmatprep.subr.bf16.mxu0 0
    %262 = vmatpush1.bf16.msra.mxu0 %v244
    %263 = vmatprep.subr.bf16.mxu0 0
    %264 = vmatpush1.bf16.msra.mxu0 %v245
    %265 = vmatprep.subr.bf16.mxu0 0
    %266 = vmatpush1.bf16.msra.mxu0 %v246
    %267 = vmatprep.subr.bf16.mxu0 0
    %268 = vmatpush1.bf16.msra.mxu0 %v247
    %269 = vmatprep.subr.bf16.mxu0 0
    %270 = vmatpush1.bf16.msra.mxu0 %v248
    %271 = vmatprep.subr.bf16.mxu0 0
    %272 = vmatpush1.bf16.msra.mxu0 %v249
    %273 = vmatprep.subr.bf16.mxu0 0
    %274 = vmatpush1.bf16.msra.mxu0 %v250
    %275 = vmatprep.subr.bf16.mxu0 0
    %276 = vmatpush1.bf16.msra.mxu0 0
    %277 = vmatprep.subr.bf16.mxu0 0
    %278 = vmatpush1.bf16.msra.mxu0 0
    %279 = vmatprep.subr.bf16.mxu0 0
    %280 = vmatpush1.bf16.msra.mxu0 0
    %281 = vmatprep.subr.bf16.mxu0 0
    %282 = vmatpush1.bf16.msra.mxu0 0
    %283 = vmatprep.subr.bf16.mxu0 0
    %284 = vmatpush1.bf16.msra.mxu0 0
    %285 = vmatprep.subr.bf16.mxu0 0
    %286 = vmatpush1.bf16.msra.mxu0 0
    %287 = vmatprep.subr.bf16.mxu0 0
    %288 = vmatpush1.bf16.msra.mxu0 0
    %289 = vmatprep.subr.bf16.mxu0 0
    %290 = vmatpush1.bf16.msra.mxu0 0
    %291 = vmatprep.mubr.bf16.mxu0 0
    %292 = vmatmul.mubr.bf16.gmra.mrb[0].mxu0 %v209
    %v293 = vpop.f32.mrb[0].mxu0
    %v294 = vadd.f32 %v199, %v293
    %v295 = vpop.f32.mrb[0].mxu0
    %v296 = vpop.f32.mrb[0].mxu0
    %v297 = vadd.f32 %v202, %v296
    %v298 = vpop.f32.mrb[0].mxu0
    %299 = vdwg.mxu0
    %v300 = vmax.f32 %v294, 0.0
    %v301 = vmax.f32 %v297, 0.0
    %v302 = vmul.f32 %v300, %v300
    %v303 = vmul.f32 %v301, %v301
    %304 = vadd.xlane.f32.xlu0 %v302
    %v305 = vpop.xlane.xlu0 %304
    %306 = vadd.xlane.f32.xlu0 %v303
    %v307 = vpop.xlane.xlu0 %306
    %v308 = vmax.f32 %v305, 1e-24
    %v309 = vmax.f32 %v307, 1e-24
    %v310 = vrsqrt.pop %v308
    %v311 = vrsqrt.pop %v309
    %v312 = vmul.f32 %v300, %v310
    %v313 = vmul.f32 %v301, %v311
    %314 = vst [vmem:[#allocation10] sm:$0xff] %v312
    %315 = vst [vmem:[#allocation10 + $0x8] sm:$0xff] %v313
    // Predicated region
    $region34: #{tpu_custom_call.1} parent=1 // pred_check
      _
    $region35: #{tpu_custom_call.1} parent=1 // pred_check_branch
      %317 = sbr.rel (0) target = $region37
    $region36: #{tpu_custom_call.1} parent=1 // pred_region
      %s319 = ssub.s32 256, 256
      %320 = vsyncadd [#allocation4], %s319
      %s321 = sshll.u32 [#allocation10], 4
      %s322 = int_to_ptr.vmem [resolvable:$true] %s321
      %327 = dma.vmem_to_hbm [thread:$0]  %s322, 256, %s4, [#allocation4], 128, 128, 8
    $region37: #{tpu_custom_call.1} parent=1 // pred_fallthru
      _
    // Predicated region
    $region38: #{tpu_custom_call.1} parent=1 // pred_check
      _
    $region39: #{tpu_custom_call.1} parent=1 // pred_check_branch
      %329 = sbr.rel (0) target = $region41
    $region40: #{tpu_custom_call.1} parent=1 // pred_region
      %330 = dma.done [#allocation4], 256
    $region41: #{tpu_custom_call.1} parent=1 // pred_fallthru
      _
    %331 = vsyncpa [#allocation3], 1
    %332 = vsyncpa [#allocation6], 1
    %333 = vsyncpa [#allocation9], 1
    %334 = vsyncpa [#allocation4], 1

// kernel: tpu_custom_call.1
$region0: #{tpu_custom_call.1}
  #allocation0 [shape = 'u32[]', space=smem, size = 0x4, offset = 0x4, fixed_abs, tag = 'smem constant byte address 0x4 - core index']
  #allocation1 [shape = 'u32[144,128]{1,0:T(1,128)}', space=vmem, size = 0x12000, scoped, tag = 'internal scratch']
  %s0 = inlined_call_operand.hbm [shape: bf16[16,128], index: 0, kind: input, shape index: {}]
  %s1 = inlined_call_operand.hbm [shape: bf16[16,128], index: 1, kind: input, shape index: {}]
  %s2 = inlined_call_operand.hbm [shape: bf16[128,128], index: 2, kind: input, shape index: {}]
  %s3 = inlined_call_operand.hbm [shape: bf16[128,128], index: 3, kind: input, shape index: {}]
  %s4 = inlined_call_operand.hbm [shape: f32[16,128], index: 4, kind: output, shape index: {}]
  %s5 = sld [smem:[#allocation0]]
  $region42: #{tpu_custom_call.1} parent=0
    _
  %s7 = ssub.s32 1, %s5
  %s8 = scalar_select 0, %s7, %s5
  $region1: #{tpu_custom_call.1} parent=0
    #allocation2 [shape = 'u8[4096]{0}', space=vmem, size = 0x1000, scoped, tag = 'input window, operand 0, single buffered']
    #allocation3 [shape = 's32[1]{0}', space=sflag, size = 0x4, scoped, tag = 'scoped memory for tpu_custom_call.1']
    #allocation4 [shape = 's32[1]{0}', space=sflag, size = 0x4, scoped, tag = 'scoped memory for tpu_custom_call.1']
    #allocation5 [shape = 'u8[4096]{0}', space=vmem, size = 0x1000, scoped, tag = 'input window, operand 1, single buffered']
    #allocation6 [shape = 's32[1]{0}', space=sflag, size = 0x4, scoped, tag = 'scoped memory for tpu_custom_call.1']
    #allocation7 [shape = 'u8[32768]{0}', space=vmem, size = 0x8000, scoped, tag = 'input window, operand 2, single buffered']
    #allocation8 [shape = 'u8[32768]{0}', space=vmem, size = 0x8000, scoped, tag = 'input window, operand 3, single buffered']
    #allocation9 [shape = 's32[1]{0}', space=sflag, size = 0x4, scoped, tag = 'scoped memory for tpu_custom_call.1']
    #allocation10 [shape = 'u8[8192]{0}', space=vmem, size = 0x2000, scoped, tag = 'output window, operand 0, single buffered']
    %9 = vsyncpa [#allocation3], 0
    %10 = vsyncpa [#allocation6], 0
    %11 = vsyncpa [#allocation9], 0
    %12 = vsyncpa [#allocation4], 0
    // Predicated region
    $region2: #{tpu_custom_call.1} parent=1 // pred_check
      _
    $region3: #{tpu_custom_call.1} parent=1 // pred_check_branch
      %14 = sbr.rel (0) target = $region5
    $region4: #{tpu_custom_call.1} parent=1 // pred_region
      %s16 = ssub.s32 128, 128
      %17 = vsyncadd [#allocation3], %s16
      %s18 = sshll.u32 [#allocation2], 4
      %s19 = int_to_ptr.vmem [resolvable:$true] %s18
      %24 = dma.hbm_to_vmem [thread:$0]  %s0, 128, %s19, [#allocation3], 64, 64, 4
    $region5: #{tpu_custom_call.1} parent=1 // pred_fallthru
      _
    // Predicated region
    $region6: #{tpu_custom_call.1} parent=1 // pred_check
      _
    $region7: #{tpu_custom_call.1} parent=1 // pred_check_branch
      %26 = sbr.rel (0) target = $region9
    $region8: #{tpu_custom_call.1} parent=1 // pred_region
      %s28 = ssub.s32 128, 128
      %29 = vsyncadd [#allocation6], %s28
      %s30 = sshll.u32 [#allocation5], 4
      %s31 = int_to_ptr.vmem [resolvable:$true] %s30
      %36 = dma.hbm_to_vmem [thread:$0]  %s1, 128, %s31, [#allocation6], 64, 64, 4
    $region9: #{tpu_custom_call.1} parent=1 // pred_fallthru
      _
    // Predicated region
    $region10: #{tpu_custom_call.1} parent=1 // pred_check
      _
    $region11: #{tpu_custom_call.1} parent=1 // pred_check_branch
      %38 = sbr.rel (0) target = $region13
    $region12: #{tpu_custom_call.1} parent=1 // pred_region
      %s40 = ssub.s32 1024, 1024
      %41 = vsyncadd [#allocation6], %s40
      %s42 = sshll.u32 [#allocation7], 4
      %s43 = int_to_ptr.vmem [resolvable:$true] %s42
      %48 = dma.hbm_to_vmem [thread:$0]  %s2, 1024, %s43, [#allocation6], 64, 64, 4
    $region13: #{tpu_custom_call.1} parent=1 // pred_fallthru
      _
    // Predicated region
    $region14: #{tpu_custom_call.1} parent=1 // pred_check
      _
    $region15: #{tpu_custom_call.1} parent=1 // pred_check_branch
      %50 = sbr.rel (0) target = $region17
    $region16: #{tpu_custom_call.1} parent=1 // pred_region
      %s52 = ssub.s32 1024, 1024
      %53 = vsyncadd [#allocation9], %s52
      %s54 = sshll.u32 [#allocation8], 4
      %s55 = int_to_ptr.vmem [resolvable:$true] %s54
      %60 = dma.hbm_to_vmem [thread:$0]  %s3, 1024, %s55, [#allocation9], 64, 64, 4
    $region17: #{tpu_custom_call.1} parent=1 // pred_fallthru
      _
    // Predicated region
    $region18: #{tpu_custom_call.1} parent=1 // pred_check
      _
    $region19: #{tpu_custom_call.1} parent=1 // pred_check_branch
      %62 = sbr.rel (0) target = $region21
    $region20: #{tpu_custom_call.1} parent=1 // pred_region
      %63 = dma.done [#allocation3], 128
    $region21: #{tpu_custom_call.1} parent=1 // pred_fallthru
      _
    // Predicated region
    $region22: #{tpu_custom_call.1} parent=1 // pred_check
      _
    $region23: #{tpu_custom_call.1} parent=1 // pred_check_branch
      %65 = sbr.rel (0) target = $region25
    $region24: #{tpu_custom_call.1} parent=1 // pred_region
      %66 = dma.done [#allocation6], 128
    $region25: #{tpu_custom_call.1} parent=1 // pred_fallthru
      _
    // Predicated region
    $region26: #{tpu_custom_call.1} parent=1 // pred_check
      _
    $region27: #{tpu_custom_call.1} parent=1 // pred_check_branch
      %68 = sbr.rel (0) target = $region29
    $region28: #{tpu_custom_call.1} parent=1 // pred_region
      %69 = dma.done [#allocation6], 1024
    $region29: #{tpu_custom_call.1} parent=1 // pred_fallthru
      _
    // Predicated region
    $region30: #{tpu_custom_call.1} parent=1 // pred_check
      _
    $region31: #{tpu_custom_call.1} parent=1 // pred_check_branch
      %71 = sbr.rel (0) target = $region33
    $region32: #{tpu_custom_call.1} parent=1 // pred_region
      %72 = dma.done [#allocation9], 1024
    $region33: #{tpu_custom_call.1} parent=1 // pred_fallthru
      _
    %v74 = vld [vmem:[#allocation2] sm:$0xf]
    %v75 = vld [vmem:[#allocation2 + $0x4] sm:$0xf]
    %v76 = vld [vmem:[#allocation5] sm:$0xf]
    %v77 = vld [vmem:[#allocation5 + $0x4] sm:$0xf]
    %v78 = vld [vmem:[#allocation7] sm:$0xf]
    %v79 = vld [vmem:[#allocation7 + $0x4] sm:$0xf]
    %v80 = vld [vmem:[#allocation7 + $0x8] sm:$0xf]
    %v81 = vld [vmem:[#allocation7 + $0xc] sm:$0xf]
    %v82 = vld [vmem:[#allocation7 + $0x10] sm:$0xf]
    %v83 = vld [vmem:[#allocation7 + $0x14] sm:$0xf]
    %v84 = vld [vmem:[#allocation7 + $0x18] sm:$0xf]
    %v85 = vld [vmem:[#allocation7 + $0x1c] sm:$0xf]
    %v86 = vld [vmem:[#allocation7 + $0x20] sm:$0xf]
    %v87 = vld [vmem:[#allocation7 + $0x24] sm:$0xf]
    %v88 = vld [vmem:[#allocation7 + $0x28] sm:$0xf]
    %v89 = vld [vmem:[#allocation7 + $0x2c] sm:$0xf]
    %v90 = vld [vmem:[#allocation7 + $0x30] sm:$0xf]
    %v91 = vld [vmem:[#allocation7 + $0x34] sm:$0xf]
    %v92 = vld [vmem:[#allocation7 + $0x38] sm:$0xf]
    %v93 = vld [vmem:[#allocation7 + $0x3c] sm:$0xf]
    %v94 = vld [vmem:[#allocation8] sm:$0xf]
    %v95 = vld [vmem:[#allocation8 + $0x4] sm:$0xf]
    %v96 = vld [vmem:[#allocation8 + $0x8] sm:$0xf]
    %v97 = vld [vmem:[#allocation8 + $0xc] sm:$0xf]
    %v98 = vld [vmem:[#allocation8 + $0x10] sm:$0xf]
    %v99 = vld [vmem:[#allocation8 + $0x14] sm:$0xf]
    %v100 = vld [vmem:[#allocation8 + $0x18] sm:$0xf]
    %v101 = vld [vmem:[#allocation8 + $0x1c] sm:$0xf]
    %v102 = vld [vmem:[#allocation8 + $0x20] sm:$0xf]
    %v103 = vld [vmem:[#allocation8 + $0x24] sm:$0xf]
    %v104 = vld [vmem:[#allocation8 + $0x28] sm:$0xf]
    %v105 = vld [vmem:[#allocation8 + $0x2c] sm:$0xf]
    %v106 = vld [vmem:[#allocation8 + $0x30] sm:$0xf]
    %v107 = vld [vmem:[#allocation8 + $0x34] sm:$0xf]
    %v108 = vld [vmem:[#allocation8 + $0x38] sm:$0xf]
    %v109 = vld [vmem:[#allocation8 + $0x3c] sm:$0xf]
    %v112 = vunpack.c.l.b16 %v76
    %v113 = vunpack.c.l.b16 %v77
    %v114 = vpack.c.b16 %v113, %v112
    %v132 = vunpack.c.l.b16 %v94
    %v133 = vunpack.c.l.b16 %v95
    %v134 = vunpack.c.l.b16 %v96
    %v135 = vunpack.c.l.b16 %v97
    %v136 = vunpack.c.l.b16 %v98
    %v137 = vunpack.c.l.b16 %v99
    %v138 = vunpack.c.l.b16 %v100
    %v139 = vunpack.c.l.b16 %v101
    %v140 = vunpack.c.l.b16 %v102
    %v141 = vunpack.c.l.b16 %v103
    %v142 = vunpack.c.l.b16 %v104
    %v143 = vunpack.c.l.b16 %v105
    %v144 = vunpack.c.l.b16 %v106
    %v145 = vunpack.c.l.b16 %v107
    %v146 = vunpack.c.l.b16 %v108
    %v147 = vunpack.c.l.b16 %v109
    %v148 = vpack.c.b16 %v133, %v132
    %v149 = vpack.c.b16 %v135, %v134
    %v150 = vpack.c.b16 %v137, %v136
    %v151 = vpack.c.b16 %v139, %v138
    %v152 = vpack.c.b16 %v141, %v140
    %v153 = vpack.c.b16 %v143, %v142
    %v154 = vpack.c.b16 %v145, %v144
    %v155 = vpack.c.b16 %v147, %v146
    %164 = vmatprep.subr.bf16.mxu0 0
    %165 = vmatpush1.bf16.msra.mxu0 %v148
    %166 = vmatprep.subr.bf16.mxu0 0
    %167 = vmatpush1.bf16.msra.mxu0 %v149
    %168 = vmatprep.subr.bf16.mxu0 0
    %169 = vmatpush1.bf16.msra.mxu0 %v150
    %170 = vmatprep.subr.bf16.mxu0 0
    %171 = vmatpush1.bf16.msra.mxu0 %v151
    %172 = vmatprep.subr.bf16.mxu0 0
    %173 = vmatpush1.bf16.msra.mxu0 %v152
    %174 = vmatprep.subr.bf16.mxu0 0
    %175 = vmatpush1.bf16.msra.mxu0 %v153
    %176 = vmatprep.subr.bf16.mxu0 0
    %177 = vmatpush1.bf16.msra.mxu0 %v154
    %178 = vmatprep.subr.bf16.mxu0 0
    %179 = vmatpush1.bf16.msra.mxu0 %v155
    %180 = vmatprep.subr.bf16.mxu0 0
    %181 = vmatpush1.bf16.msra.mxu0 0
    %182 = vmatprep.subr.bf16.mxu0 0
    %183 = vmatpush1.bf16.msra.mxu0 0
    %184 = vmatprep.subr.bf16.mxu0 0
    %185 = vmatpush1.bf16.msra.mxu0 0
    %186 = vmatprep.subr.bf16.mxu0 0
    %187 = vmatpush1.bf16.msra.mxu0 0
    %188 = vmatprep.subr.bf16.mxu0 0
    %189 = vmatpush1.bf16.msra.mxu0 0
    %190 = vmatprep.subr.bf16.mxu0 0
    %191 = vmatpush1.bf16.msra.mxu0 0
    %192 = vmatprep.subr.bf16.mxu0 0
    %193 = vmatpush1.bf16.msra.mxu0 0
    %194 = vmatprep.subr.bf16.mxu0 0
    %195 = vmatpush1.bf16.msra.mxu0 0
    %196 = vmatprep.mubr.bf16.mxu0 0
    %197 = vmatmul.mubr.bf16.gmra.mrb[0].mxu0 %v114
    %v198 = vpop.f32.mrb[0].mxu0
    %v199 = vadd.f32 0.0, %v198
    %v200 = vpop.f32.mrb[0].mxu0
    %v201 = vpop.f32.mrb[0].mxu0
    %v202 = vadd.f32 0.0, %v201
    %v203 = vpop.f32.mrb[0].mxu0
    %204 = vdwg.mxu0
    %v207 = vunpack.c.l.b16 %v74
    %v208 = vunpack.c.l.b16 %v75
    %v209 = vpack.c.b16 %v208, %v207
    %v227 = vunpack.c.l.b16 %v78
    %v228 = vunpack.c.l.b16 %v79
    %v229 = vunpack.c.l.b16 %v80
    %v230 = vunpack.c.l.b16 %v81
    %v231 = vunpack.c.l.b16 %v82
    %v232 = vunpack.c.l.b16 %v83
    %v233 = vunpack.c.l.b16 %v84
    %v234 = vunpack.c.l.b16 %v85
    %v235 = vunpack.c.l.b16 %v86
    %v236 = vunpack.c.l.b16 %v87
    %v237 = vunpack.c.l.b16 %v88
    %v238 = vunpack.c.l.b16 %v89
    %v239 = vunpack.c.l.b16 %v90
    %v240 = vunpack.c.l.b16 %v91
    %v241 = vunpack.c.l.b16 %v92
    %v242 = vunpack.c.l.b16 %v93
    %v243 = vpack.c.b16 %v228, %v227
    %v244 = vpack.c.b16 %v230, %v229
    %v245 = vpack.c.b16 %v232, %v231
    %v246 = vpack.c.b16 %v234, %v233
    %v247 = vpack.c.b16 %v236, %v235
    %v248 = vpack.c.b16 %v238, %v237
    %v249 = vpack.c.b16 %v240, %v239
    %v250 = vpack.c.b16 %v242, %v241
    %259 = vmatprep.subr.bf16.mxu0 0
    %260 = vmatpush1.bf16.msra.mxu0 %v243
    %261 = vmatprep.subr.bf16.mxu0 0
    %262 = vmatpush1.bf16.msra.mxu0 %v244
    %263 = vmatprep.subr.bf16.mxu0 0
    %264 = vmatpush1.bf16.msra.mxu0 %v245
    %265 = vmatprep.subr.bf16.mxu0 0
    %266 = vmatpush1.bf16.msra.mxu0 %v246
    %267 = vmatprep.subr.bf16.mxu0 0
    %268 = vmatpush1.bf16.msra.mxu0 %v247
    %269 = vmatprep.subr.bf16.mxu0 0
    %270 = vmatpush1.bf16.msra.mxu0 %v248
    %271 = vmatprep.subr.bf16.mxu0 0
    %272 = vmatpush1.bf16.msra.mxu0 %v249
    %273 = vmatprep.subr.bf16.mxu0 0
    %274 = vmatpush1.bf16.msra.mxu0 %v250
    %275 = vmatprep.subr.bf16.mxu0 0
    %276 = vmatpush1.bf16.msra.mxu0 0
    %277 = vmatprep.subr.bf16.mxu0 0
    %278 = vmatpush1.bf16.msra.mxu0 0
    %279 = vmatprep.subr.bf16.mxu0 0
    %280 = vmatpush1.bf16.msra.mxu0 0
    %281 = vmatprep.subr.bf16.mxu0 0
    %282 = vmatpush1.bf16.msra.mxu0 0
    %283 = vmatprep.subr.bf16.mxu0 0
    %284 = vmatpush1.bf16.msra.mxu0 0
    %285 = vmatprep.subr.bf16.mxu0 0
    %286 = vmatpush1.bf16.msra.mxu0 0
    %287 = vmatprep.subr.bf16.mxu0 0
    %288 = vmatpush1.bf16.msra.mxu0 0
    %289 = vmatprep.subr.bf16.mxu0 0
    %290 = vmatpush1.bf16.msra.mxu0 0
    %291 = vmatprep.mubr.bf16.mxu0 0
    %292 = vmatmul.mubr.bf16.gmra.mrb[0].mxu0 %v209
    %v293 = vpop.f32.mrb[0].mxu0
    %v294 = vadd.f32 %v199, %v293
    %v295 = vpop.f32.mrb[0].mxu0
    %v296 = vpop.f32.mrb[0].mxu0
    %v297 = vadd.f32 %v202, %v296
    %v298 = vpop.f32.mrb[0].mxu0
    %299 = vdwg.mxu0
    %v300 = vmax.f32 %v294, 0.0
    %v301 = vmax.f32 %v297, 0.0
    %v302 = vmul.f32 %v300, %v300
    %v303 = vmul.f32 %v301, %v301
    %304 = vadd.xlane.f32.xlu0 %v302
    %v305 = vpop.xlane.xlu0 %304
    %306 = vadd.xlane.f32.xlu0 %v303
    %v307 = vpop.xlane.xlu0 %306
    %v308 = vmax.f32 %v305, 1e-24
    %v309 = vmax.f32 %v307, 1e-24
    %v310 = vrsqrt.pop %v308
    %v311 = vrsqrt.pop %v309
    %v312 = vmul.f32 %v300, %v310
    %v313 = vmul.f32 %v301, %v311
    %314 = vst [vmem:[#allocation10] sm:$0xff] %v312
    %315 = vst [vmem:[#allocation10 + $0x8] sm:$0xff] %v313
    // Predicated region
    $region34: #{tpu_custom_call.1} parent=1 // pred_check
      _
    $region35: #{tpu_custom_call.1} parent=1 // pred_check_branch
      %317 = sbr.rel (0) target = $region37
    $region36: #{tpu_custom_call.1} parent=1 // pred_region
      %s319 = ssub.s32 256, 256
      %320 = vsyncadd [#allocation4], %s319
      %s321 = sshll.u32 [#allocation10], 4
      %s322 = int_to_ptr.vmem [resolvable:$true] %s321
      %327 = dma.vmem_to_hbm [thread:$0]  %s322, 256, %s4, [#allocation4], 128, 128, 8
    $region37: #{tpu_custom_call.1} parent=1 // pred_fallthru
      _
    // Predicated region
    $region38: #{tpu_custom_call.1} parent=1 // pred_check
      _
    $region39: #{tpu_custom_call.1} parent=1 // pred_check_branch
      %329 = sbr.rel (0) target = $region41
    $region40: #{tpu_custom_call.1} parent=1 // pred_region
      %330 = dma.done [#allocation4], 256
    $region41: #{tpu_custom_call.1} parent=1 // pred_fallthru
      _
    %331 = vsyncpa [#allocation3], 1
    %332 = vsyncpa [#allocation6], 1
    %333 = vsyncpa [#allocation9], 1
    %334 = vsyncpa [#allocation4], 1

</llo_original>
